<compile_context>
chip_gen: v5e
topology: v5e:2x2
jax: 0.10.0
libtpu: 0.0.40
codegen_flags: <defaults>
</compile_context>

<pallas_src>
import functools

import jax
import jax.numpy as jnp
from jax.experimental import pallas as pl
from jax.experimental.pallas import tpu as pltpu


def _round_up(x, m):
    return ((x + m - 1) // m) * m


def _default_tile_config():
    """(default tile_n, vmem_limit_bytes) by TPU generation."""
    try:
        kind = jax.devices()[0].device_kind.lower()
    except Exception:
        kind = ""
    if ("v5" in kind) or ("v6" in kind):
        # 128 MiB physical VMEM: use a bigger tile and a roomier scoped limit.
        return 4096, 64 * 1024 * 1024
    # v7x (64 MiB physical) / unknown: stay comfortably inside 32 MiB scoped.
    return 2048, 32 * 1024 * 1024


def focal_loss_kernel(x_ref, t_ref, *rest, gamma, n_valid, has_alpha):
    if has_alpha:
        alpha_ref, out_ref = rest
    else:
        (out_ref,) = rest

    i = pl.program_id(0)

    x = x_ref[...].astype(jnp.float32)       # (TN, C) logits, upcast in-kernel
    t = t_ref[...]                           # (TN, 1) int32 targets
    TN, C = x.shape

    # one-hot predicate built in-kernel (replaces scatter_)
    col = jax.lax.broadcasted_iota(jnp.int32, (TN, C), 1)
    is_target = col == t                     # (TN, C) bool

    # --- log-sum-exp: log_p = x[target] - logsumexp(x, axis=1) ---
    m = jnp.max(x, axis=1, keepdims=True)
    lse = m + jnp.log(jnp.sum(jnp.exp(x - m), axis=1, keepdims=True))
    x_t = jnp.sum(jnp.where(is_target, x, 0.0), axis=1, keepdims=True)  # (TN, 1)
    log_p = x_t - lse                        # <= 0

    # 1 - p == -expm1(log_p), cancellation-free as p -> 1.
    # expm1 via tanh identity (tanh lowers to the EUP): e^x - 1 = 2t/(1-t),
    # t = tanh(x/2).  log_p=0 -> 0, log_p=-inf -> 1.
    th = jnp.tanh(0.5 * log_p)               # in (-1, 0]
    one_minus = (-2.0 * th) / (1.0 - th)     # (TN, 1)

    # (1 - p)^gamma : repeated multiply for small integer gamma (VPU, not EUP pow)
    g = float(gamma)
    if g == 2.0:                             # module default
        focal = one_minus * one_minus
    elif g.is_integer() and 0 <= int(g) <= 8:
        focal = jnp.ones_like(one_minus)
        for _ in range(int(g)):
            focal = focal * one_minus
    else:
        focal = jnp.power(one_minus, jnp.float32(g))

    batch_loss = -(focal * log_p)            # (TN, 1)

    if has_alpha:
        alpha = alpha_ref[...].astype(jnp.float32)          # (1, C)
        alpha_t = jnp.sum(jnp.where(is_target, alpha, 0.0),
                          axis=1, keepdims=True)            # (TN, 1)
        batch_loss = alpha_t * batch_loss
    # else: alpha defaults to ones -> alpha_t == 1, skip the reduction entirely

    # mask padded rows of the (possibly ragged) last tile
    row = jax.lax.broadcasted_iota(jnp.int32, (TN, 1), 0)
    valid = (i * TN + row) < n_valid
    partial = jnp.sum(jnp.where(valid, batch_loss, 0.0))

    # lane-dense (1, 8, 128) partial-sum block; wrapper reads [:, 0, 0]
    out_ref[...] = jnp.broadcast_to(partial, out_ref.shape).astype(jnp.float32)


def focal_loss(inputs, targets, alpha=None, gamma=2.0, size_average=True,
               tile_n=None):
    """inputs: (N, C) logits (f32 or bf16); targets: (N,) int class ids."""
    N, C = inputs.shape
    default_tn, vmem_limit = _default_tile_config()
    if tile_n is None:
        tile_n = default_tn

    has_alpha = alpha is not None
    if has_alpha:
        # accepts (C,), (C, 1) (module default layout), etc.
        alpha_row = jnp.asarray(alpha, dtype=jnp.float32).reshape(1, C)

    targets_col = targets.reshape(N, 1).astype(jnp.int32)
    # NOTE: inputs are passed through in the caller's dtype (bf16 stays bf16);
    # the kernel upcasts to f32 internally.

    # Tile size: aligned to the sublane tile (16 for bf16, 8 otherwise), capped
    # at ~N/2 so there are >= 2 grid steps to shard across v7x's 2 TensorCores.
    align = 16 if inputs.dtype == jnp.bfloat16 else 8
    tn = _round_up(min(int(tile_n), max(N, 1)), align)
    if N >= 2 * align:
        tn = min(tn, _round_up(pl.cdiv(N, 2), align))
    num_tiles = pl.cdiv(N, tn)

    kernel = functools.partial(focal_loss_kernel, gamma=float(gamma),
                               n_valid=N, has_alpha=has_alpha)

    in_bytes = inputs.size * inputs.dtype.itemsize + 4 * N + (4 * C if has_alpha else 0)
    cost = pl.CostEstimate(
        flops=8 * N * C + 16 * N,
        transcendentals=N * C + 4 * N,
        bytes_accessed=in_bytes + num_tiles * 8 * 128 * 4,
    )

    in_specs = [
        pl.BlockSpec((tn, C), lambda i: (i, 0)),   # logits tile
        pl.BlockSpec((tn, 1), lambda i: (i, 0)),   # targets tile
    ]
    operands = [inputs, targets_col]
    if has_alpha:
        in_specs.append(pl.BlockSpec((1, C), lambda i: (0, 0)))  # alpha (resident)
        operands.append(alpha_row)

    partials = pl.pallas_call(
        kernel,
        out_shape=jax.ShapeDtypeStruct((num_tiles, 8, 128), jnp.float32),
        grid=(num_tiles,),
        in_specs=in_specs,
        out_specs=pl.BlockSpec((1, 8, 128), lambda i: (i, 0, 0)),
        compiler_params=pltpu.CompilerParams(
            dimension_semantics=("parallel",),      # shards across v7x TCs
            vmem_limit_bytes=vmem_limit,
        ),
        cost_estimate=cost,
    )(*operands)

    total = jnp.sum(partials[:, 0, 0])
    if size_average:
        return total / jnp.float32(N)
    return total


def focal_loss_ref(inputs, targets, alpha=None, gamma=2.0, size_average=True):
    """Pure-JAX reference mirroring the PyTorch forward."""
    N, C = inputs.shape
    if alpha is None:
        alpha = jnp.ones((C,), dtype=jnp.float32)
    alpha = jnp.asarray(alpha, dtype=jnp.float32).reshape(-1)
    p = jax.nn.softmax(inputs.astype(jnp.float32), axis=1)
    mask = jax.nn.one_hot(targets, C, dtype=jnp.float32)
    probs = jnp.sum(p * mask, axis=1)
    alpha_t = alpha[targets]
    batch_loss = -alpha_t * jnp.power(1.0 - probs, gamma) * jnp.log(probs)
    return jnp.mean(batch_loss) if size_average else jnp.sum(batch_loss)


if __name__ == "__main__":
    C = 138  # module default class_num

    key = jax.random.PRNGKey(0)
    k1, k2, k3, k4, k5, k6, k7 = jax.random.split(key, 7)

    # Case 1: small batch, default gamma=2, size_average=True, alpha=None
    N1 = 8
    x1 = jax.random.normal(k1, (N1, C), dtype=jnp.float32)
    t1 = jax.random.randint(k2, (N1,), 0, C, dtype=jnp.int32)
    out1 = jax.block_until_ready(focal_loss(x1, t1, gamma=2.0, size_average=True))
    ref1 = focal_loss_ref(x1, t1, gamma=2.0, size_average=True)
    assert jnp.allclose(out1, ref1, rtol=1e-5, atol=1e-5), (out1, ref1)

    # Case 2: ragged tiling (N not a multiple of tile_n), sum reduction
    N2 = 45
    x2 = 3.0 * jax.random.normal(k3, (N2, C), dtype=jnp.float32)
    t2 = jax.random.randint(k4, (N2,), 0, C, dtype=jnp.int32)
    out2 = jax.block_until_ready(
        focal_loss(x2, t2, gamma=2.0, size_average=False, tile_n=16))
    ref2 = focal_loss_ref(x2, t2, gamma=2.0, size_average=False)
    assert jnp.allclose(out2, ref2, rtol=1e-5, atol=1e-4), (out2, ref2)

    # Case 3: bf16 logits passed through, explicit alpha, multi-tile parallel grid
    N3 = 300
    x3 = (2.0 * jax.random.normal(k5, (N3, C), dtype=jnp.float32)).astype(jnp.bfloat16)
    t3 = jax.random.randint(k6, (N3,), 0, C, dtype=jnp.int32)
    a3 = 0.25 + 1.75 * jax.random.uniform(k7, (C,), dtype=jnp.float32)
    out3 = jax.block_until_ready(
        focal_loss(x3, t3, alpha=a3, gamma=2.0, size_average=True))
    ref3 = focal_loss_ref(x3, t3, alpha=a3, gamma=2.0, size_average=True)
    assert jnp.allclose(out3, ref3, rtol=5e-4, atol=5e-4), (out3, ref3)

    print("KERNEL_OK")
</pallas_src>

<mosaic_0001>
module attributes {stable_mosaic.version = 11 : i64} {
  func.func @focal_loss_kernel(%arg0: i32, %arg1: memref<8x138xf32, #tpu.memory_space<vmem>>, %arg2: memref<8x1xi32, #tpu.memory_space<vmem>>, %arg3: memref<1x8x128xf32, #tpu.memory_space<vmem>>) attributes {dimension_semantics = [#tpu.dimension_semantics<parallel>], iteration_bounds = array<i64: 1>, scalar_prefetch = 0 : i64, scratch_operands = 0 : i64, tpu.core_type = #tpu.core_type<tc>, window_params = [{transform_indices = @transform_0, window_bounds = array<i64: 8, 138>}, {transform_indices = @transform_1, window_bounds = array<i64: 8, 1>}, {transform_indices = @transform_2, window_bounds = array<i64: 1, 8, 128>}]} {
    %c0 = arith.constant 0 : index
    %c0_0 = arith.constant 0 : index
    %0 = vector.load %arg1[%c0, %c0_0] : memref<8x138xf32, #tpu.memory_space<vmem>>, vector<8x138xf32>
    %c0_1 = arith.constant 0 : index
    %c0_2 = arith.constant 0 : index
    %1 = vector.load %arg2[%c0_1, %c0_2] : memref<8x1xi32, #tpu.memory_space<vmem>>, vector<8x1xi32>
    %2 = tpu.iota {dimensions = array<i32: 1>} : vector<8x138xi32>
    %3 = vector.broadcast %1 : vector<8x1xi32> to vector<8x138xi32>
    %4 = arith.cmpi eq, %2, %3 : vector<8x138xi32>
    %cst = arith.constant dense<0xFF800000> : vector<8xf32>
    %5 = vector.multi_reduction <maximumf>, %0, %cst [1] : vector<8x138xf32> to vector<8xf32>
    %6 = vector.shape_cast %5 : vector<8xf32> to vector<8x1xf32>
    %7 = vector.broadcast %6 : vector<8x1xf32> to vector<8x138xf32>
    %8 = arith.subf %0, %7 : vector<8x138xf32>
    %9 = math.exp %8 : vector<8x138xf32>
    %cst_3 = arith.constant dense<0.000000e+00> : vector<8xf32>
    %10 = vector.multi_reduction <add>, %9, %cst_3 [1] : vector<8x138xf32> to vector<8xf32>
    %11 = vector.shape_cast %10 : vector<8xf32> to vector<8x1xf32>
    %12 = math.log %11 : vector<8x1xf32>
    %13 = arith.addf %6, %12 : vector<8x1xf32>
    %cst_4 = arith.constant 0.000000e+00 : f32
    %14 = vector.broadcast %cst_4 : f32 to vector<8x138xf32>
    %15 = arith.select %4, %0, %14 : vector<8x138xi1>, vector<8x138xf32>
    %cst_5 = arith.constant dense<0.000000e+00> : vector<8xf32>
    %16 = vector.multi_reduction <add>, %15, %cst_5 [1] : vector<8x138xf32> to vector<8xf32>
    %17 = vector.shape_cast %16 : vector<8xf32> to vector<8x1xf32>
    %18 = arith.subf %17, %13 : vector<8x1xf32>
    %cst_6 = arith.constant 5.000000e-01 : f32
    %19 = vector.broadcast %cst_6 : f32 to vector<8x1xf32>
    %20 = arith.mulf %19, %18 : vector<8x1xf32>
    %21 = math.tanh %20 : vector<8x1xf32>
    %cst_7 = arith.constant -2.000000e+00 : f32
    %22 = vector.broadcast %cst_7 : f32 to vector<8x1xf32>
    %23 = arith.mulf %22, %21 : vector<8x1xf32>
    %cst_8 = arith.constant 1.000000e+00 : f32
    %24 = vector.broadcast %cst_8 : f32 to vector<8x1xf32>
    %25 = arith.subf %24, %21 : vector<8x1xf32>
    %26 = arith.divf %23, %25 : vector<8x1xf32>
    %27 = arith.mulf %26, %26 : vector<8x1xf32>
    %28 = arith.mulf %27, %18 : vector<8x1xf32>
    %cst_9 = arith.constant 0.000000e+00 : f32
    %29 = vector.broadcast %cst_9 : f32 to vector<8x1xf32>
    %30 = arith.subf %29, %28 : vector<8x1xf32>
    %31 = tpu.iota {dimensions = array<i32: 0>} : vector<8x1xi32>
    %c8_i32 = arith.constant 8 : i32
    %32 = arith.muli %arg0, %c8_i32 : i32
    %33 = vector.broadcast %32 : i32 to vector<8x1xi32>
    %34 = arith.addi %33, %31 : vector<8x1xi32>
    %c8_i32_10 = arith.constant 8 : i32
    %35 = vector.broadcast %c8_i32_10 : i32 to vector<8x1xi32>
    %36 = arith.cmpi slt, %34, %35 : vector<8x1xi32>
    %cst_11 = arith.constant 0.000000e+00 : f32
    %37 = vector.broadcast %cst_11 : f32 to vector<8x1xf32>
    %38 = arith.select %36, %30, %37 : vector<8x1xi1>, vector<8x1xf32>
    %39 = vector.shape_cast %38 : vector<8x1xf32> to vector<1x8x1xf32>
    %cst_12 = arith.constant dense<0.000000e+00> : vector<1xf32>
    %40 = vector.multi_reduction <add>, %39, %cst_12 [1, 2] : vector<1x8x1xf32> to vector<1xf32>
    %41 = vector.shape_cast %40 : vector<1xf32> to vector<1x1x1xf32>
    %42 = vector.extract %41[0, 0, 0] : f32 from vector<1x1x1xf32>
    %43 = vector.broadcast %42 : f32 to vector<1x8x128xf32>
    %c0_13 = arith.constant 0 : index
    %c0_14 = arith.constant 0 : index
    %c0_15 = arith.constant 0 : index
    %44 = vector.load %arg3[%c0_13, %c0_14, %c0_15] : memref<1x8x128xf32, #tpu.memory_space<vmem>>, vector<1x8x128xf32>
    tpu.vector_store %arg3[%c0_13, %c0_14, %c0_15], %43 {strides = array<i32>} : memref<1x8x128xf32, #tpu.memory_space<vmem>>, vector<1x8x128xf32>,
    return
  }
  func.func @transform_0(%arg0: i32) -> (i32, i32) {
    %c0_i32 = arith.constant 0 : i32
    %c0_i32_0 = arith.constant 0 : i32
    return %arg0, %c0_i32 : i32, i32
  }
  func.func @transform_1(%arg0: i32) -> (i32, i32) {
    %c0_i32 = arith.constant 0 : i32
    %c0_i32_0 = arith.constant 0 : i32
    return %arg0, %c0_i32 : i32, i32
  }
  func.func @transform_2(%arg0: i32) -> (i32, i32, i32) {
    %c0_i32 = arith.constant 0 : i32
    %c0_i32_0 = arith.constant 0 : i32
    %c0_i32_1 = arith.constant 0 : i32
    return %arg0, %c0_i32, %c0_i32_0 : i32, i32, i32
  }
}

</mosaic_0001>

<llo_original>
// kernel: tpu_custom_call.1
$region0: #{tpu_custom_call.1}
  #allocation0 [shape = 'u32[]', space=smem, size = 0x4, offset = 0x4, fixed_abs, tag = 'smem constant byte address 0x4 - core index']
  #allocation1 [shape = 'u32[72,128]{1,0:T(1,128)}', space=vmem, size = 0x9000, scoped, tag = 'internal scratch']
  %s0 = inlined_call_operand.hbm [shape: f32[8,138], index: 0, kind: input, shape index: {}]
  %s1 = inlined_call_operand.vmem [shape: s32[8,1], index: 1, kind: input, shape index: {}]
  %s2 = inlined_call_operand.hbm [shape: f32[1,8,128], index: 2, kind: output, shape index: {}]
  %s3 = sld [smem:[#allocation0]]
  $region22: #{tpu_custom_call.1} parent=0
    _
  %s5 = ssub.s32 1, %s3
  %s6 = scalar_select 0, %s5, %s3
  $region1: #{tpu_custom_call.1} parent=0
    #allocation2 [shape = 'u8[8192]{0}', space=vmem, size = 0x2000, scoped, tag = 'input window, operand 0, single buffered']
    #allocation3 [shape = 's32[1]{0}', space=sflag, size = 0x4, scoped, tag = 'scoped memory for tpu_custom_call.1']
    #allocation4 [shape = 's32[1]{0}', space=sflag, size = 0x4, scoped, tag = 'scoped memory for tpu_custom_call.1']
    #allocation5 [shape = 'u8[4096]{0}', space=vmem, size = 0x1000, scoped, tag = 'output window, operand 0, single buffered']
    %7 = vsyncpa [#allocation3], 0
    %8 = vsyncpa [#allocation4], 0
    // Predicated region
    $region2: #{tpu_custom_call.1} parent=1 // pred_check
      _
    $region3: #{tpu_custom_call.1} parent=1 // pred_check_branch
      %10 = sbr.rel (0) target = $region5
    $region4: #{tpu_custom_call.1} parent=1 // pred_region
      %12 = vsyncadd [#allocation3], 0
      %s14 = sshll.u32 %s0, 4
      %s15 = int_to_ptr.hbm [resolvable:$true] %s14
      %s16 = sshll.u32 [#allocation2], 4
      %s17 = int_to_ptr.vmem [resolvable:$true] %s16
      %19 = dma.hbm_to_vmem [thread:$0]  %s15, 256, %s17, [#allocation3]
    $region5: #{tpu_custom_call.1} parent=1 // pred_fallthru
      _
    // Predicated region
    $region6: #{tpu_custom_call.1} parent=1 // pred_check
      _
    $region7: #{tpu_custom_call.1} parent=1 // pred_check_branch
      %21 = sbr.rel (0) target = $region9
    $region8: #{tpu_custom_call.1} parent=1 // pred_region
      _
    $region9: #{tpu_custom_call.1} parent=1 // pred_fallthru
      _
    // Predicated region
    $region10: #{tpu_custom_call.1} parent=1 // pred_check
      _
    $region11: #{tpu_custom_call.1} parent=1 // pred_check_branch
      %23 = sbr.rel (0) target = $region13
    $region12: #{tpu_custom_call.1} parent=1 // pred_region
      %25 = dma.done [#allocation3], 256
    $region13: #{tpu_custom_call.1} parent=1 // pred_fallthru
      _
    %v26 = vld [vmem:[#allocation2] sm:$0xff]
    %v27 = vld [vmem:[#allocation2 + $0x8] sm:$0xff]
    %v28 = vld [vmem:[%s1] sm:$0xff]
    %v29 = vlaneseq
    %v30 = vand.u32 %v29, 127
    %v31 = vadd.s32 %v30, 128
    %32 = vset.pattern.permute.xlu0 0
    %33 = vperm.xlu0 %32, %v28
    %v34 = vpop.permute.xlu0 %33
    %vm35 = vcmp.eq.s32.totalorder %v30, %v34
    %vm36 = vcmp.eq.s32.totalorder %v31, %v34
    %vm37 = vcmask 80896
    %v38 = vsel %vm37, %v27, -inf
    %v39 = vmax.f32 %v26, %v38
    %40 = vmax.xlane.f32.xlu0 %v39
    %v41 = vpop.xlane.xlu0 %40
    %v42 = vsub.f32 %v26, %v41
    %v43 = vsub.f32 %v27, %v41
    %v44 = vmul.f32 %v42, 1.442695
    %v45 = vpow.pop %v44
    %v46 = vmul.f32 %v43, 1.442695
    %v47 = vpow.pop %v46
    %v48 = vsel %vm37, %v47, 0.0
    %v49 = vadd.f32 %v45, %v48
    %50 = vadd.xlane.f32.xlu0 %v49
    %v51 = vpop.xlane.xlu0 %50
    %v52 = vlog2.pop %v51
    %v53 = vmul.f32 %v52, 0.6931472
    %v54 = vadd.f32 %v41, %v53
    %v55 = vsel %vm35, %v26, 0.0
    %v56 = vsel %vm36, %v27, 0.0
    %v57 = vsel %vm37, %v56, 0.0
    %v58 = vadd.f32 %v55, %v57
    %59 = vadd.xlane.f32.xlu0 %v58
    %v60 = vpop.xlane.xlu0 %59
    %v61 = vsub.f32 %v60, %v54
    %v62 = vmul.f32 %v61, 0.5
    %v63 = vtanh.pop %v62
    %v64 = vmul.f32 %v63, -2.0
    %v65 = vsub.f32 1.0, %v63
    %v66 = vrcp.pop %v65
    %v67 = vmul.f32 %v65, %v66
    %v68 = vsub.f32 1.0, %v67
    %v69 = vmul.f32 %v66, %v68
    %v70 = vadd.f32 %v66, %v69
    %vm71 = vweird.f32 %v65
    %vm72 = vweird.f32 %v66
    %vm73 = vmor %vm71, %vm72
    %v74 = vsel %vm73, %v66, %v70
    %v75 = vand.u32 2147483647, %v65
    %vm76 = vcmp.eq.f32.partialorder %v75, 8.507059e+37
    %v77 = vand.u32 %v65, 2147483648
    %v78 = vor.u32 1.1754944e-38, %v77
    %v79 = vsel %vm76, %v78, %v74
    %v80 = vmul.f32 %v64, %v79
    %v81 = vmul.f32 %v80, %v80
    %v82 = vmul.f32 %v81, %v61
    %v83 = vsub.f32 0.0, %v82
    %v84 = vlaneseq
    %v85 = vshrl.u32 %v84, 7
    %s86 = smul.u32 0, 8
    %v87 = vstv %s86
    %v88 = vadd.s32 %v87, %v85
    %vm89 = vcmp.lt.s32.totalorder %v88, 8
    %v90 = vsel %vm89, %v83, 0.0
    %vm91 = vcmask 7168
    %v92 = vsel %vm91, %v90, 0.0
    %93 = vadd.xlane.f32.xlu0 %v92
    %v94 = vpop.xlane.xlu0 %93
    %v95 = vrot.slane %v94, 4
    %v96 = vadd.f32 %v94, %v95
    %v97 = vrot.slane %v96, 2
    %v98 = vadd.f32 %v96, %v97
    %v99 = vrot.slane %v98, 1
    %v100 = vadd.f32 %v98, %v99
    %s101 = vtos %v100
    %v102 = vstv %s101
    %103 = vst [vmem:[#allocation5] sm:$0xff] %v102
    // Predicated region
    $region14: #{tpu_custom_call.1} parent=1 // pred_check
      _
    $region15: #{tpu_custom_call.1} parent=1 // pred_check_branch
      %105 = sbr.rel (0) target = $region17
    $region16: #{tpu_custom_call.1} parent=1 // pred_region
      %107 = vsyncadd [#allocation4], 0
      %s109 = sshll.u32 [#allocation5], 4
      %s110 = int_to_ptr.vmem [resolvable:$true] %s109
      %s111 = sshll.u32 %s2, 4
      %s112 = int_to_ptr.hbm [resolvable:$true] %s111
      %114 = dma.vmem_to_hbm [thread:$0]  %s110, 128, %s112, [#allocation4]
    $region17: #{tpu_custom_call.1} parent=1 // pred_fallthru
      _
    // Predicated region
    $region18: #{tpu_custom_call.1} parent=1 // pred_check
      _
    $region19: #{tpu_custom_call.1} parent=1 // pred_check_branch
      %116 = sbr.rel (0) target = $region21
    $region20: #{tpu_custom_call.1} parent=1 // pred_region
      %118 = dma.done [#allocation4], 128
    $region21: #{tpu_custom_call.1} parent=1 // pred_fallthru
      _
    %119 = vsyncpa [#allocation3], 1
    %120 = vsyncpa [#allocation4], 1

</llo_original>
